<compile_context>
chip_gen: v5e
topology: v5e:2x2
jax: 0.10.0
libtpu: 0.0.40
codegen_flags: <defaults>
</compile_context>

<pallas_src>
import jax
import jax.numpy as jnp
from jax.experimental import pallas as pl
from jax.experimental.pallas import tpu as pltpu

_LANE = 128


def _round_up(x, m):
    return ((x + m - 1) // m) * m


# ------------------------------------------------------------------ kernel

def _val_embed_kernel(code_ref, w_ref, b_ref, o_ref):
    # Fused  y = code_tile @ W_code + b_eff  for one row tile (MXU + VPU add).
    o_ref[...] = (
        jnp.dot(code_ref[...], w_ref[...], preferred_element_type=jnp.float32)
        + b_ref[...]
    )


# ------------------------------------------------------------- param fold

def fold_val_embed_params(emb, w, b):
    """Fold the constant embedding-table contribution of ValEmbed.

    `w` is the fc weight stored pre-transposed as ((E+1)*V, L)
    (torch Linear weight.T); row index k = v*(E+1) + j, where j == 0 is the
    code-value slot and j in [1, E] are the embedding dims of vocab entry v.

    Returns (W_code (V, L_pad), b_eff (1, L_pad), L) with L_pad = round_up(L, 128)
    so the kernel's output stores are lane-dense; padded columns are zero.
    """
    V, E = emb.shape
    L = w.shape[1]
    w3 = w.reshape(V, E + 1, L)
    w_code = w3[:, 0, :]                                                  # (V, L)
    b_eff = b.reshape(1, L) + jnp.einsum("ve,vel->l", emb, w3[:, 1:, :])[None, :]
    l_pad = _round_up(L, _LANE)
    if l_pad != L:
        w_code = jnp.pad(w_code, ((0, 0), (0, l_pad - L)))
        b_eff = jnp.pad(b_eff, ((0, 0), (0, l_pad - L)))
    return w_code.astype(jnp.float32), b_eff.astype(jnp.float32), L


# --------------------------------------------------------------- wrapper

def val_embed_forward(code, w_code, b_eff, latent_size, *, row_tile=None):
    """code (B, T, V) -> (B, T, latent_size) float32, single pallas_call."""
    B, T, V = code.shape
    l_pad = w_code.shape[1]
    M = B * T

    if row_tile is None:
        # One big tile per grid step; keep >= 8 rows for the (8,128) rule and
        # cap so VMEM stays comfortable at large batch.
        row_tile = min(512, _round_up(M, 8))
    m_pad = _round_up(M, row_tile)

    x = code.reshape(M, V).astype(jnp.float32)
    if m_pad != M:
        x = jnp.pad(x, ((0, m_pad - M), (0, 0)))

    y = pl.pallas_call(
        _val_embed_kernel,
        out_shape=jax.ShapeDtypeStruct((m_pad, l_pad), jnp.float32),
        grid=(m_pad // row_tile,),
        in_specs=[
            # (row_tile, V): rows multiple of 8, last dim = full V (allowed).
            pl.BlockSpec((row_tile, V), lambda i: (i, 0)),
            # Folded weight & bias: whole-array blocks, constant index_map ->
            # resident in VMEM across the grid.
            pl.BlockSpec((V, l_pad), lambda i: (0, 0)),
            pl.BlockSpec((1, l_pad), lambda i: (0, 0)),
        ],
        # Lane-dense output block (l_pad is a multiple of 128).
        out_specs=pl.BlockSpec((row_tile, l_pad), lambda i: (i, 0)),
        compiler_params=pltpu.CompilerParams(
            # Row tiles are independent -> shard across TensorCores on v7x.
            dimension_semantics=("parallel",),
        ),
    )(x, w_code, b_eff)

    return y[:M, :latent_size].reshape(B, T, latent_size)


# --------------------------------------------------------------------- main

if __name__ == "__main__":
    # Small shapes consistent with the module: batch=2, seq=8,
    # code_vocab_size=5, embed_size=4, latent_size=16.
    B, T = 2, 8
    V, E, L = 5, 4, 16

    key = jax.random.PRNGKey(0)
    k_code, k_emb, k_w, k_b = jax.random.split(key, 4)
    code = jax.random.uniform(k_code, (B, T, V), jnp.float32)
    emb = (0.1 * jax.random.normal(k_emb, (V, E))).astype(jnp.float32)
    w = (0.1 * jax.random.normal(k_w, ((E + 1) * V, L))).astype(jnp.float32)
    b = (0.1 * jax.random.normal(k_b, (1, L))).astype(jnp.float32)

    # Fold once at init (input-independent), then run the fused kernel.
    w_code, b_eff, latent = fold_val_embed_params(emb, w, b)
    fwd = jax.jit(lambda c, wc, be: val_embed_forward(c, wc, be, latent))
    out = fwd(code, w_code, b_eff)
    jax.block_until_ready(out)

    # Reference: the literal (unfolded) ValEmbed forward in plain JAX,
    # mirroring the PyTorch broadcast + concat + fc path.
    emb_b = jnp.broadcast_to(emb[None, None], (B, T, V, E))
    feat = jnp.concatenate([code[..., None], emb_b], axis=3).reshape(B, T, V * (E + 1))
    ref = feat @ w + b

    assert out.shape == (B, T, L)
    assert bool(jnp.allclose(out, ref, atol=1e-5, rtol=1e-5))
    print("KERNEL_OK")
</pallas_src>

<mosaic_0001>
module attributes {stable_mosaic.version = 11 : i64} {
  func.func @_val_embed_kernel(%arg0: i32, %arg1: memref<16x5xf32, #tpu.memory_space<vmem>>, %arg2: memref<5x128xf32, #tpu.memory_space<vmem>>, %arg3: memref<1x128xf32, #tpu.memory_space<vmem>>, %arg4: memref<16x128xf32, #tpu.memory_space<vmem>>) attributes {dimension_semantics = [#tpu.dimension_semantics<parallel>], iteration_bounds = array<i64: 1>, scalar_prefetch = 0 : i64, scratch_operands = 0 : i64, tpu.core_type = #tpu.core_type<tc>, window_params = [{transform_indices = @transform_0, window_bounds = array<i64: 16, 5>}, {pipeline_mode = #tpu.pipeline_mode<synchronous>, transform_indices = @transform_1, window_bounds = array<i64: 5, 128>}, {pipeline_mode = #tpu.pipeline_mode<synchronous>, transform_indices = @transform_2, window_bounds = array<i64: 1, 128>}, {transform_indices = @transform_3, window_bounds = array<i64: 16, 128>}]} {
    %c0 = arith.constant 0 : index
    %c0_0 = arith.constant 0 : index
    %0 = vector.load %arg1[%c0, %c0_0] : memref<16x5xf32, #tpu.memory_space<vmem>>, vector<16x5xf32>
    %c0_1 = arith.constant 0 : index
    %c0_2 = arith.constant 0 : index
    %1 = vector.load %arg2[%c0_1, %c0_2] : memref<5x128xf32, #tpu.memory_space<vmem>>, vector<5x128xf32>
    %cst = arith.constant dense<0.000000e+00> : vector<16x128xf32>
    %2 = tpu.matmul %0, %1, %cst {dimension_numbers = #tpu.dot_dimension_numbers<[1], [0], [0], [1], [0, 0, 1, 1], [], []>} : vector<16x5xf32>, vector<5x128xf32>, vector<16x128xf32> -> vector<16x128xf32>
    %c0_3 = arith.constant 0 : index
    %c0_4 = arith.constant 0 : index
    %3 = vector.load %arg3[%c0_3, %c0_4] : memref<1x128xf32, #tpu.memory_space<vmem>>, vector<1x128xf32>
    %4 = vector.broadcast %3 : vector<1x128xf32> to vector<16x128xf32>
    %5 = arith.addf %2, %4 : vector<16x128xf32>
    %c0_5 = arith.constant 0 : index
    %c0_6 = arith.constant 0 : index
    %6 = vector.load %arg4[%c0_5, %c0_6] : memref<16x128xf32, #tpu.memory_space<vmem>>, vector<16x128xf32>
    tpu.vector_store %arg4[%c0_5, %c0_6], %5 {strides = array<i32>} : memref<16x128xf32, #tpu.memory_space<vmem>>, vector<16x128xf32>,
    return
  }
  func.func @transform_0(%arg0: i32) -> (i32, i32) {
    %c0_i32 = arith.constant 0 : i32
    %c0_i32_0 = arith.constant 0 : i32
    return %arg0, %c0_i32 : i32, i32
  }
  func.func @transform_1(%arg0: i32) -> (i32, i32) {
    %c0_i32 = arith.constant 0 : i32
    %c0_i32_0 = arith.constant 0 : i32
    %c0_i32_1 = arith.constant 0 : i32
    return %c0_i32, %c0_i32_0 : i32, i32
  }
  func.func @transform_2(%arg0: i32) -> (i32, i32) {
    %c0_i32 = arith.constant 0 : i32
    %c0_i32_0 = arith.constant 0 : i32
    %c0_i32_1 = arith.constant 0 : i32
    return %c0_i32, %c0_i32_0 : i32, i32
  }
  func.func @transform_3(%arg0: i32) -> (i32, i32) {
    %c0_i32 = arith.constant 0 : i32
    %c0_i32_0 = arith.constant 0 : i32
    return %arg0, %c0_i32 : i32, i32
  }
}

</mosaic_0001>

<llo_original>
// kernel: _lambda_.1
$region0: #{_lambda_.1}
  #allocation0 [shape = 'u32[]', space=smem, size = 0x4, offset = 0x4, fixed_abs, tag = 'smem constant byte address 0x4 - core index']
  #allocation1 [shape = 'u32[72,128]{1,0:T(1,128)}', space=vmem, size = 0x9000, scoped, tag = 'internal scratch']
  %s0 = inlined_call_operand.vmem [shape: f32[16,5], index: 0, kind: input, shape index: {}]
  %s1 = inlined_call_operand.vmem [shape: f32[5,128], index: 1, kind: input, shape index: {}]
  %s2 = inlined_call_operand.vmem [shape: f32[1,128], index: 2, kind: input, shape index: {}]
  %s3 = inlined_call_operand.vmem [shape: f32[16,128], index: 3, kind: output, shape index: {}]
  %s4 = sld [smem:[#allocation0]]
  $region22: #{_lambda_.1} parent=0
    _
  %s6 = ssub.s32 1, %s4
  %s7 = scalar_select 0, %s6, %s4
  // Predicated region
  $region2: #{_lambda_.1} parent=0 // pred_check
    _
  $region3: #{_lambda_.1} parent=0 // pred_check_branch
    %9 = sbr.rel (0) target = $region5
  $region4: #{_lambda_.1} parent=0 // pred_region
    _
  $region5: #{_lambda_.1} parent=0 // pred_fallthru
    _
  // Predicated region
  $region6: #{_lambda_.1} parent=0 // pred_check
    _
  $region7: #{_lambda_.1} parent=0 // pred_check_branch
    %11 = sbr.rel (0) target = $region9
  $region8: #{_lambda_.1} parent=0 // pred_region
    _
  $region9: #{_lambda_.1} parent=0 // pred_fallthru
    _
  // Predicated region
  $region10: #{_lambda_.1} parent=0 // pred_check
    _
  $region11: #{_lambda_.1} parent=0 // pred_check_branch
    %13 = sbr.rel (0) target = $region13
  $region12: #{_lambda_.1} parent=0 // pred_region
    _
  $region13: #{_lambda_.1} parent=0 // pred_fallthru
    _
  %v14 = vld [vmem:[%s0] sm:$0xff]
  %v15 = vld [vmem:[%s0 + $0x8] sm:$0xff]
  %v16 = vld [vmem:[%s1] sm:$0x1f]
  %v17 = vld [vmem:[%s2] sm:$0x1]
  %v19 = vperm.slane %v17, 0
  %vm21 = vcmask 39936
  %v23 = vsel %vm21, %v14, 0
  %v26 = vsel %vm21, %v15, 0
  %vm28 = vcmask 1044480
  %v30 = vsel %vm28, %v16, 0
  %32 = vmatpush.msra.mxu0 0.0
  %33 = vmatpush.msra.mxu0 0.0
  %34 = vmatpush.msra.mxu0 0.0
  %35 = vmatpush.msra.mxu0 0.0
  %36 = vmatpush.msra.mxu0 0.0
  %37 = vmatpush.msra.mxu0 0.0
  %38 = vmatpush.msra.mxu0 0.0
  %39 = vmatpush.msra.mxu0 0.0
  %40 = vmatpush.msra.mxu0 0.0
  %41 = vmatpush.msra.mxu0 0.0
  %42 = vmatpush.msra.mxu0 0.0
  %43 = vmatpush.msra.mxu0 0.0
  %44 = vmatpush.msra.mxu0 0.0
  %45 = vmatpush.msra.mxu0 0.0
  %46 = vmatpush.msra.mxu0 0.0
  %47 = vmatpush.msra.mxu0 %v30
  %48 = vmatmul.f32.gmra.mxu0 %v23
  %v49 = vpop.f32.mrf.mxu0
  %v50 = vadd.f32 %v19, %v49
  %51 = vmatmul.f32.gmra.mxu0 %v26
  %v52 = vpop.f32.mrf.mxu0
  %v53 = vadd.f32 %v19, %v52
  %54 = vdwg.mxu0
  %55 = vst [vmem:[%s3] sm:$0xff] %v50
  %56 = vst [vmem:[%s3 + $0x8] sm:$0xff] %v53
  // Predicated region
  $region14: #{_lambda_.1} parent=0 // pred_check
    _
  $region15: #{_lambda_.1} parent=0 // pred_check_branch
    %58 = sbr.rel (0) target = $region17
  $region16: #{_lambda_.1} parent=0 // pred_region
    _
  $region17: #{_lambda_.1} parent=0 // pred_fallthru
    _
  // Predicated region
  $region18: #{_lambda_.1} parent=0 // pred_check
    _
  $region19: #{_lambda_.1} parent=0 // pred_check_branch
    %60 = sbr.rel (0) target = $region21
  $region20: #{_lambda_.1} parent=0 // pred_region
    _
  $region21: #{_lambda_.1} parent=0 // pred_fallthru
    _

</llo_original>
